<compile_context>
chip_gen: v6e
topology: v6e:2x2x1
jax: 0.10.0
libtpu: 0.0.40
codegen_flags: <defaults>
</compile_context>

<pallas_src>
import math
import jax
import jax.numpy as jnp
from jax.experimental import pallas as pl
from jax.experimental.pallas import tpu as pltpu

LANE, SUB = 128, 8


def gcn_kernel(d_ref, a_ref, x_ref, w1_ref, w2_ref, w3_ref, out_ref, feat_ref):
    """Fused 3-layer GCN forward, single VMEM block.

    Per layer: h_out = D @ A @ D @ h_in @ W with D = diag(d) folded into the
    activations (d * (A @ (d * h))).  MXU operands bf16, f32 accumulation.
    """
    d = d_ref[...]                        # (Np, 1)  f32 degree normalization
    a = a_ref[...]                        # (Np, Np) bf16 adjacency

    def aggregate(h_f32):
        # D @ A @ D @ h  ==  d * (A @ (d * h));  row scales on the VPU (f32).
        hs = (d * h_f32).astype(jnp.bfloat16)
        return d * jnp.dot(a, hs, preferred_element_type=jnp.float32)

    x = x_ref[...].astype(jnp.float32)    # (Np, Fp)

    # ---- gc1: (DAD @ x) @ W1 ----
    h1 = jnp.dot(aggregate(x).astype(jnp.bfloat16), w1_ref[...],
                 preferred_element_type=jnp.float32)
    feat_ref[...] = h1.astype(feat_ref.dtype)     # lane-dense f32 store

    # ReLU in f32 (v5e VPU has no bf16); dropout is identity in eval mode.
    # TODO(synk): training-mode dropout would need the in-kernel PRNG path.
    h = jnp.maximum(h1, 0.0)

    # ---- gc2: (DAD @ h) @ W2, then ReLU ----
    h2 = jnp.dot(aggregate(h).astype(jnp.bfloat16), w2_ref[...],
                 preferred_element_type=jnp.float32)
    h2 = jnp.maximum(h2, 0.0)

    # ---- gc3: DAD @ (h2 @ W3) ----  (project first: class_num <= hidden_dim)
    p3 = jnp.dot(h2.astype(jnp.bfloat16), w3_ref[...],
                 preferred_element_type=jnp.float32)
    out_ref[...] = aggregate(p3).astype(out_ref.dtype)   # lane-dense f32 store


def _round_up(v, m):
    return ((v + m - 1) // m) * m


def _pad2d(m, rows, cols, dtype):
    r, c = m.shape
    return jnp.pad(m.astype(dtype), ((0, rows - r), (0, cols - c)))


def make_gcn(w1, w2, w3, A, D):
    """One-time setup (hoisted out of the per-call path): pad + cast the weights
    and the static graph, build the pallas_call, and return a jitted forward(x)
    -> (logits [N,C], features [N,H1]).  Per call only x is padded/cast."""
    N = A.shape[0]
    F_in, H1 = w1.shape
    H2 = w2.shape[1]
    C = w3.shape[1]

    Np = _round_up(N, SUB)
    Fp = _round_up(F_in, LANE)
    H1p = _round_up(H1, LANE)
    H2p = _round_up(H2, LANE)
    Cp = _round_up(C, LANE)

    # D is the diagonal degree-normalization matrix -> ship only its diagonal.
    # TODO(synk): jnp.diagonal drops off-diagonal entries; only valid for diagonal D.
    d_col = jnp.pad(jnp.diagonal(D).astype(jnp.float32), (0, Np - N)).reshape(Np, 1)
    A_p = _pad2d(A, Np, Np, jnp.bfloat16)
    w1_p = _pad2d(w1, Fp, H1p, jnp.bfloat16)
    w2_p = _pad2d(w2, H1p, H2p, jnp.bfloat16)
    w3_p = _pad2d(w3, H2p, Cp, jnp.bfloat16)

    # VMEM budget sized from the actual resident buffers (v7x has only 64 MiB
    # physical / 32 MiB scoped-default; v5e scoped default is 16 MiB).
    io_bytes = (d_col.size * 4 + A_p.size * 2 + Np * Fp * 2
                + w1_p.size * 2 + w2_p.size * 2 + w3_p.size * 2
                + Np * Cp * 4 + Np * H1p * 4)
    vmem_bytes = int(min(max(2 * io_bytes + (4 << 20), 16 << 20), 100 << 20))

    flops = 2 * Np * Np * (Fp + H1p + Cp) + 2 * Np * (Fp * H1p + H1p * H2p + H2p * Cp)
    cost = pl.CostEstimate(flops=flops, transcendentals=0, bytes_accessed=io_bytes)

    full = lambda shape: pl.BlockSpec(shape, lambda: (0,) * len(shape))

    kernel_call = pl.pallas_call(
        gcn_kernel,
        out_shape=(
            jax.ShapeDtypeStruct((Np, Cp), jnp.float32),    # padded logits
            jax.ShapeDtypeStruct((Np, H1p), jnp.float32),   # padded features
        ),
        grid=(),
        in_specs=[
            full(d_col.shape), full(A_p.shape), full((Np, Fp)),
            full(w1_p.shape), full(w2_p.shape), full(w3_p.shape),
        ],
        out_specs=(full((Np, Cp)), full((Np, H1p))),
        compiler_params=pltpu.CompilerParams(vmem_limit_bytes=vmem_bytes),
        cost_estimate=cost,
    )

    @jax.jit
    def forward(x):
        x_p = _pad2d(x, Np, Fp, jnp.bfloat16)   # only per-call prep remaining
        out_p, feat_p = kernel_call(d_col, A_p, x_p, w1_p, w2_p, w3_p)
        # Slice padding back off outside the kernel (kept lane-dense inside).
        return out_p[:N, :C], feat_p[:N, :H1]

    return forward


def init_weight(key, in_features, out_features):
    # GraphConvolution.reset_parameters: U(-stdv, stdv), stdv = 1/sqrt(out_features)
    stdv = 1.0 / math.sqrt(out_features)
    return jax.random.uniform(key, (in_features, out_features),
                              dtype=jnp.float32, minval=-stdv, maxval=stdv)


if __name__ == "__main__":
    # Small, config-like dims.
    N = 16                 # number of graph nodes
    features_dim = 32      # config.features_dim_num
    hidden_dim = 64        # config.GCN_hidderlayer_dim_num
    class_num = 8          # config.class_num

    key = jax.random.PRNGKey(0)
    kx, ka, kw1, kw2, kw3 = jax.random.split(key, 5)

    x = jax.random.normal(kx, (N, features_dim), dtype=jnp.float32)

    # Symmetric adjacency with self-loops.
    A_rand = jax.random.uniform(ka, (N, N), dtype=jnp.float32)
    A = ((A_rand + A_rand.T) > 1.0).astype(jnp.float32)
    A = A + jnp.eye(N, dtype=jnp.float32)
    # D^{-1/2} normalized (diagonal) degree matrix.
    deg = jnp.sum(A, axis=1)
    D = jnp.diag(1.0 / jnp.sqrt(deg)).astype(jnp.float32)

    w1 = init_weight(kw1, features_dim, features_dim)   # gc1
    w2 = init_weight(kw2, features_dim, hidden_dim)     # gc2
    w3 = init_weight(kw3, hidden_dim, class_num)        # gc3

    gcn = make_gcn(w1, w2, w3, A, D)   # one-time pad/cast hoisted here
    out, features = gcn(x)
    jax.block_until_ready((out, features))

    # Sanity check against plain-JAX f32 reference (PyTorch forward semantics).
    DAD = D @ A @ D
    h1 = DAD @ x @ w1
    ref_feat = h1
    h = jnp.maximum(h1, 0.0)
    h2 = jnp.maximum(DAD @ h @ w2, 0.0)
    ref_out = DAD @ h2 @ w3

    assert out.shape == (N, class_num) and features.shape == (N, features_dim)
    # bf16 MXU operands -> looser tolerance than a pure-f32 pass.
    assert jnp.allclose(features, ref_feat, atol=5e-2, rtol=5e-2), \
        float(jnp.max(jnp.abs(features - ref_feat)))
    assert jnp.allclose(out, ref_out, atol=5e-2, rtol=5e-2), \
        float(jnp.max(jnp.abs(out - ref_out)))

    print("KERNEL_OK")
</pallas_src>

<mosaic_0001>
module attributes {stable_mosaic.version = 11 : i64} {
  func.func @gcn_kernel(%arg0: memref<16x1xf32, #tpu.memory_space<vmem>>, %arg1: memref<16x16xbf16, #tpu.memory_space<vmem>>, %arg2: memref<16x128xbf16, #tpu.memory_space<vmem>>, %arg3: memref<128x128xbf16, #tpu.memory_space<vmem>>, %arg4: memref<128x128xbf16, #tpu.memory_space<vmem>>, %arg5: memref<128x128xbf16, #tpu.memory_space<vmem>>, %arg6: memref<16x128xf32, #tpu.memory_space<vmem>>, %arg7: memref<16x128xf32, #tpu.memory_space<vmem>>) attributes {dimension_semantics = [], scalar_prefetch = 0 : i64, scratch_operands = 0 : i64, tpu.core_type = #tpu.core_type<tc>} {
    %c0 = arith.constant 0 : index
    %c0_0 = arith.constant 0 : index
    %0 = vector.load %arg0[%c0, %c0_0] : memref<16x1xf32, #tpu.memory_space<vmem>>, vector<16x1xf32>
    %c0_1 = arith.constant 0 : index
    %c0_2 = arith.constant 0 : index
    %1 = vector.load %arg1[%c0_1, %c0_2] : memref<16x16xbf16, #tpu.memory_space<vmem>>, vector<16x16xbf16>
    %c0_3 = arith.constant 0 : index
    %c0_4 = arith.constant 0 : index
    %2 = vector.load %arg2[%c0_3, %c0_4] : memref<16x128xbf16, #tpu.memory_space<vmem>>, vector<16x128xbf16>
    %3 = arith.extf %2 : vector<16x128xbf16> to vector<16x128xf32>
    %4 = vector.broadcast %0 : vector<16x1xf32> to vector<16x128xf32>
    %5 = arith.mulf %4, %3 : vector<16x128xf32>
    %6 = arith.truncf %5 : vector<16x128xf32> to vector<16x128xbf16>
    %cst = arith.constant dense<0.000000e+00> : vector<16x128xf32>
    %7 = tpu.matmul %1, %6, %cst {dimension_numbers = #tpu.dot_dimension_numbers<[1], [0], [0], [1], [0, 0, 1, 1], [], []>} : vector<16x16xbf16>, vector<16x128xbf16>, vector<16x128xf32> -> vector<16x128xf32>
    %8 = vector.broadcast %0 : vector<16x1xf32> to vector<16x128xf32>
    %9 = arith.mulf %8, %7 : vector<16x128xf32>
    %10 = arith.truncf %9 : vector<16x128xf32> to vector<16x128xbf16>
    %c0_5 = arith.constant 0 : index
    %c0_6 = arith.constant 0 : index
    %11 = vector.load %arg3[%c0_5, %c0_6] : memref<128x128xbf16, #tpu.memory_space<vmem>>, vector<128x128xbf16>
    %cst_7 = arith.constant dense<0.000000e+00> : vector<16x128xf32>
    %12 = tpu.matmul %10, %11, %cst_7 {dimension_numbers = #tpu.dot_dimension_numbers<[1], [0], [0], [1], [0, 0, 1, 1], [], []>} : vector<16x128xbf16>, vector<128x128xbf16>, vector<16x128xf32> -> vector<16x128xf32>
    %c0_8 = arith.constant 0 : index
    %c0_9 = arith.constant 0 : index
    %13 = vector.load %arg7[%c0_8, %c0_9] : memref<16x128xf32, #tpu.memory_space<vmem>>, vector<16x128xf32>
    tpu.vector_store %arg7[%c0_8, %c0_9], %12 {strides = array<i32>} : memref<16x128xf32, #tpu.memory_space<vmem>>, vector<16x128xf32>,
    %cst_10 = arith.constant 0.000000e+00 : f32
    %14 = vector.broadcast %cst_10 : f32 to vector<16x128xf32>
    %15 = arith.maximumf %12, %14 : vector<16x128xf32>
    %16 = vector.broadcast %0 : vector<16x1xf32> to vector<16x128xf32>
    %17 = arith.mulf %16, %15 : vector<16x128xf32>
    %18 = arith.truncf %17 : vector<16x128xf32> to vector<16x128xbf16>
    %cst_11 = arith.constant dense<0.000000e+00> : vector<16x128xf32>
    %19 = tpu.matmul %1, %18, %cst_11 {dimension_numbers = #tpu.dot_dimension_numbers<[1], [0], [0], [1], [0, 0, 1, 1], [], []>} : vector<16x16xbf16>, vector<16x128xbf16>, vector<16x128xf32> -> vector<16x128xf32>
    %20 = vector.broadcast %0 : vector<16x1xf32> to vector<16x128xf32>
    %21 = arith.mulf %20, %19 : vector<16x128xf32>
    %22 = arith.truncf %21 : vector<16x128xf32> to vector<16x128xbf16>
    %c0_12 = arith.constant 0 : index
    %c0_13 = arith.constant 0 : index
    %23 = vector.load %arg4[%c0_12, %c0_13] : memref<128x128xbf16, #tpu.memory_space<vmem>>, vector<128x128xbf16>
    %cst_14 = arith.constant dense<0.000000e+00> : vector<16x128xf32>
    %24 = tpu.matmul %22, %23, %cst_14 {dimension_numbers = #tpu.dot_dimension_numbers<[1], [0], [0], [1], [0, 0, 1, 1], [], []>} : vector<16x128xbf16>, vector<128x128xbf16>, vector<16x128xf32> -> vector<16x128xf32>
    %cst_15 = arith.constant 0.000000e+00 : f32
    %25 = vector.broadcast %cst_15 : f32 to vector<16x128xf32>
    %26 = arith.maximumf %24, %25 : vector<16x128xf32>
    %27 = arith.truncf %26 : vector<16x128xf32> to vector<16x128xbf16>
    %c0_16 = arith.constant 0 : index
    %c0_17 = arith.constant 0 : index
    %28 = vector.load %arg5[%c0_16, %c0_17] : memref<128x128xbf16, #tpu.memory_space<vmem>>, vector<128x128xbf16>
    %cst_18 = arith.constant dense<0.000000e+00> : vector<16x128xf32>
    %29 = tpu.matmul %27, %28, %cst_18 {dimension_numbers = #tpu.dot_dimension_numbers<[1], [0], [0], [1], [0, 0, 1, 1], [], []>} : vector<16x128xbf16>, vector<128x128xbf16>, vector<16x128xf32> -> vector<16x128xf32>
    %30 = vector.broadcast %0 : vector<16x1xf32> to vector<16x128xf32>
    %31 = arith.mulf %30, %29 : vector<16x128xf32>
    %32 = arith.truncf %31 : vector<16x128xf32> to vector<16x128xbf16>
    %cst_19 = arith.constant dense<0.000000e+00> : vector<16x128xf32>
    %33 = tpu.matmul %1, %32, %cst_19 {dimension_numbers = #tpu.dot_dimension_numbers<[1], [0], [0], [1], [0, 0, 1, 1], [], []>} : vector<16x16xbf16>, vector<16x128xbf16>, vector<16x128xf32> -> vector<16x128xf32>
    %34 = vector.broadcast %0 : vector<16x1xf32> to vector<16x128xf32>
    %35 = arith.mulf %34, %33 : vector<16x128xf32>
    %c0_20 = arith.constant 0 : index
    %c0_21 = arith.constant 0 : index
    %36 = vector.load %arg6[%c0_20, %c0_21] : memref<16x128xf32, #tpu.memory_space<vmem>>, vector<16x128xf32>
    tpu.vector_store %arg6[%c0_20, %c0_21], %35 {strides = array<i32>} : memref<16x128xf32, #tpu.memory_space<vmem>>, vector<16x128xf32>,
    return
  }
}

</mosaic_0001>

<llo_original>
// kernel: forward.1
$region0: #{forward.1}
  #allocation0 [shape = 'u32[]', space=smem, size = 0x4, offset = 0x4, fixed_abs, tag = 'smem constant byte address 0x4 - core index']
  #allocation1 [shape = 'u32[144,128]{1,0:T(1,128)}', space=vmem, size = 0x12000, scoped, tag = 'internal scratch']
  %s0 = inlined_call_operand.vmem [shape: f32[16,1], index: 0, kind: input, shape index: {}]
  %s1 = inlined_call_operand.vmem [shape: bf16[16,16], index: 1, kind: input, shape index: {}]
  %s2 = inlined_call_operand.vmem [shape: bf16[16,128], index: 2, kind: input, shape index: {}]
  %s3 = inlined_call_operand.hbm [shape: bf16[128,128], index: 3, kind: input, shape index: {}]
  %s4 = inlined_call_operand.hbm [shape: bf16[128,128], index: 4, kind: input, shape index: {}]
  %s5 = inlined_call_operand.hbm [shape: bf16[128,128], index: 5, kind: input, shape index: {}]
  %s6 = inlined_call_operand.vmem [shape: f32[16,128], index: 6, kind: output, shape index: {0}]
  %s7 = inlined_call_operand.hbm [shape: f32[16,128], index: 7, kind: output, shape index: {1}]
  %8 = xla_tuple %s6, %s7
  %s9 = sld [smem:[#allocation0]]
  $region54: #{forward.1} parent=0
    _
  %s11 = ssub.s32 1, %s9
  %s12 = scalar_select 0, %s11, %s9
  $region1: #{forward.1} parent=0
    #allocation2 [shape = 'u8[32768]{0}', space=vmem, size = 0x8000, scoped, tag = 'input window, operand 3, single buffered']
    #allocation3 [shape = 's32[1]{0}', space=sflag, size = 0x4, scoped, tag = 'scoped memory for forward.1']
    #allocation4 [shape = 's32[1]{0}', space=sflag, size = 0x4, scoped, tag = 'scoped memory for forward.1']
    #allocation5 [shape = 'u8[32768]{0}', space=vmem, size = 0x8000, scoped, tag = 'input window, operand 4, single buffered']
    #allocation6 [shape = 's32[1]{0}', space=sflag, size = 0x4, scoped, tag = 'scoped memory for forward.1']
    #allocation7 [shape = 'u8[32768]{0}', space=vmem, size = 0x8000, scoped, tag = 'input window, operand 5, single buffered']
    #allocation8 [shape = 'u8[8192]{0}', space=vmem, size = 0x2000, scoped, tag = 'output window, operand 1, single buffered']
    %13 = vsyncpa [#allocation3], 0
    %14 = vsyncpa [#allocation6], 0
    %15 = vsyncpa [#allocation4], 0
    // Predicated region
    $region2: #{forward.1} parent=1 // pred_check
      _
    $region3: #{forward.1} parent=1 // pred_check_branch
      %17 = sbr.rel (0) target = $region5
    $region4: #{forward.1} parent=1 // pred_region
      _
    $region5: #{forward.1} parent=1 // pred_fallthru
      _
    // Predicated region
    $region6: #{forward.1} parent=1 // pred_check
      _
    $region7: #{forward.1} parent=1 // pred_check_branch
      %19 = sbr.rel (0) target = $region9
    $region8: #{forward.1} parent=1 // pred_region
      _
    $region9: #{forward.1} parent=1 // pred_fallthru
      _
    // Predicated region
    $region10: #{forward.1} parent=1 // pred_check
      _
    $region11: #{forward.1} parent=1 // pred_check_branch
      %21 = sbr.rel (0) target = $region13
    $region12: #{forward.1} parent=1 // pred_region
      _
    $region13: #{forward.1} parent=1 // pred_fallthru
      _
    // Predicated region
    $region14: #{forward.1} parent=1 // pred_check
      _
    $region15: #{forward.1} parent=1 // pred_check_branch
      %23 = sbr.rel (0) target = $region17
    $region16: #{forward.1} parent=1 // pred_region
      %s25 = ssub.s32 1024, 1024
      %26 = vsyncadd [#allocation3], %s25
      %s27 = sshll.u32 [#allocation2], 4
      %s28 = int_to_ptr.vmem [resolvable:$true] %s27
      %33 = dma.hbm_to_vmem [thread:$0]  %s3, 1024, %s28, [#allocation3], 64, 64, 4
    $region17: #{forward.1} parent=1 // pred_fallthru
      _
    // Predicated region
    $region18: #{forward.1} parent=1 // pred_check
      _
    $region19: #{forward.1} parent=1 // pred_check_branch
      %35 = sbr.rel (0) target = $region21
    $region20: #{forward.1} parent=1 // pred_region
      %s37 = ssub.s32 1024, 1024
      %38 = vsyncadd [#allocation6], %s37
      %s39 = sshll.u32 [#allocation5], 4
      %s40 = int_to_ptr.vmem [resolvable:$true] %s39
      %45 = dma.hbm_to_vmem [thread:$0]  %s4, 1024, %s40, [#allocation6], 64, 64, 4
    $region21: #{forward.1} parent=1 // pred_fallthru
      _
    // Predicated region
    $region22: #{forward.1} parent=1 // pred_check
      _
    $region23: #{forward.1} parent=1 // pred_check_branch
      %47 = sbr.rel (0) target = $region25
    $region24: #{forward.1} parent=1 // pred_region
      %s49 = ssub.s32 1024, 1024
      %50 = vsyncadd [#allocation6], %s49
      %s51 = sshll.u32 [#allocation7], 4
      %s52 = int_to_ptr.vmem [resolvable:$true] %s51
      %57 = dma.hbm_to_vmem [thread:$0]  %s5, 1024, %s52, [#allocation6], 64, 64, 4
    $region25: #{forward.1} parent=1 // pred_fallthru
      _
    // Predicated region
    $region26: #{forward.1} parent=1 // pred_check
      _
    $region27: #{forward.1} parent=1 // pred_check_branch
      %59 = sbr.rel (0) target = $region29
    $region28: #{forward.1} parent=1 // pred_region
      %60 = dma.done [#allocation3], 1024
    $region29: #{forward.1} parent=1 // pred_fallthru
      _
    // Predicated region
    $region30: #{forward.1} parent=1 // pred_check
      _
    $region31: #{forward.1} parent=1 // pred_check_branch
      %62 = sbr.rel (0) target = $region33
    $region32: #{forward.1} parent=1 // pred_region
      %63 = dma.done [#allocation6], 1024
    $region33: #{forward.1} parent=1 // pred_fallthru
      _
    // Predicated region
    $region34: #{forward.1} parent=1 // pred_check
      _
    $region35: #{forward.1} parent=1 // pred_check_branch
      %65 = sbr.rel (0) target = $region37
    $region36: #{forward.1} parent=1 // pred_region
      %66 = dma.done [#allocation6], 1024
    $region37: #{forward.1} parent=1 // pred_fallthru
      _
    %v68 = vld [vmem:[%s0] sm:$0xff]
    %v69 = vld [vmem:[%s0 + $0x8] sm:$0xff]
    %v70 = vld [vmem:[%s1] sm:$0xf]
    %v71 = vld [vmem:[%s1 + $0x4] sm:$0xf]
    %v72 = vld [vmem:[%s2] sm:$0xf]
    %v73 = vld [vmem:[%s2 + $0x4] sm:$0xf]
    %v74 = vunpack.c.l.bf16 %v72
    %v75 = vunpack.c.l.bf16 %v73
    %77 = vset.pattern.permute.xlu0 0
    %78 = vperm.xlu0 %77, %v68
    %v79 = vpop.permute.xlu0 %78
    %82 = vset.pattern.permute.xlu0 0
    %83 = vperm.xlu0 %82, %v69
    %v84 = vpop.permute.xlu0 %83
    %v86 = vmul.f32 %v79, %v74
    %v87 = vmul.f32 %v84, %v75
    %v88 = vpack.c.bf16 %v87, %v86
    %v91 = vunpack.c.l.b16 %v70
    %v92 = vunpack.c.l.b16 %v71
    %v93 = vpack.c.b16 %v92, %v91
    %vm94 = vcmask 130048
    %v96 = vsel %vm94, %v93, 0
    %98 = vmatprep.subr.bf16.mxu0 0
    %99 = vmatpush1.bf16.msra.mxu0 0
    %100 = vmatprep.subr.bf16.mxu0 0
    %101 = vmatpush1.bf16.msra.mxu0 0
    %102 = vmatprep.subr.bf16.mxu0 0
    %103 = vmatpush1.bf16.msra.mxu0 0
    %104 = vmatprep.subr.bf16.mxu0 0
    %105 = vmatpush1.bf16.msra.mxu0 0
    %106 = vmatprep.subr.bf16.mxu0 0
    %107 = vmatpush1.bf16.msra.mxu0 0
    %108 = vmatprep.subr.bf16.mxu0 0
    %109 = vmatpush1.bf16.msra.mxu0 0
    %110 = vmatprep.subr.bf16.mxu0 0
    %111 = vmatpush1.bf16.msra.mxu0 0
    %112 = vmatprep.subr.bf16.mxu0 0
    %113 = vmatpush1.bf16.msra.mxu0 %v88
    %114 = vmatprep.subr.bf16.mxu0 0
    %115 = vmatpush2.bf16.msra.mxu0 0
    %116 = vmatprep.subr.bf16.mxu0 0
    %117 = vmatpush2.bf16.msra.mxu0 0
    %118 = vmatprep.subr.bf16.mxu0 0
    %119 = vmatpush2.bf16.msra.mxu0 0
    %120 = vmatprep.subr.bf16.mxu0 0
    %121 = vmatpush2.bf16.msra.mxu0 0
    %122 = vmatprep.subr.bf16.mxu0 0
    %123 = vmatpush2.bf16.msra.mxu0 0
    %124 = vmatprep.subr.bf16.mxu0 0
    %125 = vmatpush2.bf16.msra.mxu0 0
    %126 = vmatprep.subr.bf16.mxu0 0
    %127 = vmatpush2.bf16.msra.mxu0 0
    %128 = vmatprep.subr.bf16.mxu0 0
    %129 = vmatpush2.bf16.msra.mxu0 0
    %130 = vmatprep.mubr.bf16.mxu0 0
    %131 = vmatmul.mubr.bf16.gmra.mxu0 %v96
    %v132 = vpop.f32.mrf.mxu0
    %v133 = vadd.f32 0.0, %v132
    %v134 = vpop.f32.mrf.mxu0
    %v135 = vpop.f32.mrf.mxu0
    %v136 = vadd.f32 0.0, %v135
    %v137 = vpop.f32.mrf.mxu0
    %138 = vdwg.mxu0
    %v139 = vmul.f32 %v79, %v133
    %v140 = vmul.f32 %v84, %v136
    %v141 = vpack.c.bf16 %v140, %v139
    %v142 = vld [vmem:[#allocation2] sm:$0xf]
    %v143 = vld [vmem:[#allocation2 + $0x4] sm:$0xf]
    %v144 = vld [vmem:[#allocation2 + $0x8] sm:$0xf]
    %v145 = vld [vmem:[#allocation2 + $0xc] sm:$0xf]
    %v146 = vld [vmem:[#allocation2 + $0x10] sm:$0xf]
    %v147 = vld [vmem:[#allocation2 + $0x14] sm:$0xf]
    %v148 = vld [vmem:[#allocation2 + $0x18] sm:$0xf]
    %v149 = vld [vmem:[#allocation2 + $0x1c] sm:$0xf]
    %v150 = vld [vmem:[#allocation2 + $0x20] sm:$0xf]
    %v151 = vld [vmem:[#allocation2 + $0x24] sm:$0xf]
    %v152 = vld [vmem:[#allocation2 + $0x28] sm:$0xf]
    %v153 = vld [vmem:[#allocation2 + $0x2c] sm:$0xf]
    %v154 = vld [vmem:[#allocation2 + $0x30] sm:$0xf]
    %v155 = vld [vmem:[#allocation2 + $0x34] sm:$0xf]
    %v156 = vld [vmem:[#allocation2 + $0x38] sm:$0xf]
    %v157 = vld [vmem:[#allocation2 + $0x3c] sm:$0xf]
    %v174 = vunpack.c.l.b16 %v142
    %v175 = vunpack.c.l.b16 %v143
    %v176 = vunpack.c.l.b16 %v144
    %v177 = vunpack.c.l.b16 %v145
    %v178 = vunpack.c.l.b16 %v146
    %v179 = vunpack.c.l.b16 %v147
    %v180 = vunpack.c.l.b16 %v148
    %v181 = vunpack.c.l.b16 %v149
    %v182 = vunpack.c.l.b16 %v150
    %v183 = vunpack.c.l.b16 %v151
    %v184 = vunpack.c.l.b16 %v152
    %v185 = vunpack.c.l.b16 %v153
    %v186 = vunpack.c.l.b16 %v154
    %v187 = vunpack.c.l.b16 %v155
    %v188 = vunpack.c.l.b16 %v156
    %v189 = vunpack.c.l.b16 %v157
    %v190 = vpack.c.b16 %v175, %v174
    %v191 = vpack.c.b16 %v177, %v176
    %v192 = vpack.c.b16 %v179, %v178
    %v193 = vpack.c.b16 %v181, %v180
    %v194 = vpack.c.b16 %v183, %v182
    %v195 = vpack.c.b16 %v185, %v184
    %v196 = vpack.c.b16 %v187, %v186
    %v197 = vpack.c.b16 %v189, %v188
    %206 = vmatprep.subr.bf16.mxu0 0
    %207 = vmatpush1.bf16.msra.mxu0 %v197
    %208 = vmatprep.subr.bf16.mxu0 0
    %209 = vmatpush1.bf16.msra.mxu0 %v196
    %210 = vmatprep.subr.bf16.mxu0 0
    %211 = vmatpush1.bf16.msra.mxu0 %v195
    %212 = vmatprep.subr.bf16.mxu0 0
    %213 = vmatpush1.bf16.msra.mxu0 %v194
    %214 = vmatprep.subr.bf16.mxu0 0
    %215 = vmatpush1.bf16.msra.mxu0 %v193
    %216 = vmatprep.subr.bf16.mxu0 0
    %217 = vmatpush1.bf16.msra.mxu0 %v192
    %218 = vmatprep.subr.bf16.mxu0 0
    %219 = vmatpush1.bf16.msra.mxu0 %v191
    %220 = vmatprep.subr.bf16.mxu0 0
    %221 = vmatpush1.bf16.msra.mxu0 %v190
    %222 = vmatprep.subr.bf16.mxu0 0
    %223 = vmatpush2.bf16.msra.mxu0 0
    %224 = vmatprep.subr.bf16.mxu0 0
    %225 = vmatpush2.bf16.msra.mxu0 0
    %226 = vmatprep.subr.bf16.mxu0 0
    %227 = vmatpush2.bf16.msra.mxu0 0
    %228 = vmatprep.subr.bf16.mxu0 0
    %229 = vmatpush2.bf16.msra.mxu0 0
    %230 = vmatprep.subr.bf16.mxu0 0
    %231 = vmatpush2.bf16.msra.mxu0 0
    %232 = vmatprep.subr.bf16.mxu0 0
    %233 = vmatpush2.bf16.msra.mxu0 0
    %234 = vmatprep.subr.bf16.mxu0 0
    %235 = vmatpush2.bf16.msra.mxu0 0
    %236 = vmatprep.subr.bf16.mxu0 0
    %237 = vmatpush2.bf16.msra.mxu0 0
    %238 = vmatprep.mubr.bf16.mxu0 0
    %239 = vmatmul.mubr.bf16.gmra.mxu0 %v141
    %v240 = vpop.f32.mrf.mxu0
    %v241 = vadd.f32 0.0, %v240
    %v242 = vpop.f32.mrf.mxu0
    %v243 = vpop.f32.mrf.mxu0
    %v244 = vadd.f32 0.0, %v243
    %v245 = vpop.f32.mrf.mxu0
    %246 = vdwg.mxu0
    %247 = vst [vmem:[#allocation8] sm:$0xff] %v241
    %248 = vst [vmem:[#allocation8 + $0x8] sm:$0xff] %v244
    %v249 = vmax.f32 %v241, 0.0
    %v250 = vmax.f32 %v244, 0.0
    %v251 = vmul.f32 %v79, %v249
    %v252 = vmul.f32 %v84, %v250
    %v253 = vpack.c.bf16 %v252, %v251
    %254 = vmatprep.subr.bf16.mxu0 0
    %255 = vmatpush1.bf16.msra.mxu0 0
    %256 = vmatprep.subr.bf16.mxu0 0
    %257 = vmatpush1.bf16.msra.mxu0 0
    %258 = vmatprep.subr.bf16.mxu0 0
    %259 = vmatpush1.bf16.msra.mxu0 0
    %260 = vmatprep.subr.bf16.mxu0 0
    %261 = vmatpush1.bf16.msra.mxu0 0
    %262 = vmatprep.subr.bf16.mxu0 0
    %263 = vmatpush1.bf16.msra.mxu0 0
    %264 = vmatprep.subr.bf16.mxu0 0
    %265 = vmatpush1.bf16.msra.mxu0 0
    %266 = vmatprep.subr.bf16.mxu0 0
    %267 = vmatpush1.bf16.msra.mxu0 0
    %268 = vmatprep.subr.bf16.mxu0 0
    %269 = vmatpush1.bf16.msra.mxu0 %v253
    %270 = vmatprep.subr.bf16.mxu0 0
    %271 = vmatpush2.bf16.msra.mxu0 0
    %272 = vmatprep.subr.bf16.mxu0 0
    %273 = vmatpush2.bf16.msra.mxu0 0
    %274 = vmatprep.subr.bf16.mxu0 0
    %275 = vmatpush2.bf16.msra.mxu0 0
    %276 = vmatprep.subr.bf16.mxu0 0
    %277 = vmatpush2.bf16.msra.mxu0 0
    %278 = vmatprep.subr.bf16.mxu0 0
    %279 = vmatpush2.bf16.msra.mxu0 0
    %280 = vmatprep.subr.bf16.mxu0 0
    %281 = vmatpush2.bf16.msra.mxu0 0
    %282 = vmatprep.subr.bf16.mxu0 0
    %283 = vmatpush2.bf16.msra.mxu0 0
    %284 = vmatprep.subr.bf16.mxu0 0
    %285 = vmatpush2.bf16.msra.mxu0 0
    %286 = vmatprep.mubr.bf16.mxu0 0
    %287 = vmatmul.mubr.bf16.gmra.mxu0 %v96
    %v288 = vpop.f32.mrf.mxu0
    %v289 = vadd.f32 0.0, %v288
    %v290 = vpop.f32.mrf.mxu0
    %v291 = vpop.f32.mrf.mxu0
    %v292 = vadd.f32 0.0, %v291
    %v293 = vpop.f32.mrf.mxu0
    %294 = vdwg.mxu0
    %v295 = vmul.f32 %v79, %v289
    %v296 = vmul.f32 %v84, %v292
    %v297 = vpack.c.bf16 %v296, %v295
    %v298 = vld [vmem:[#allocation5] sm:$0xf]
    %v299 = vld [vmem:[#allocation5 + $0x4] sm:$0xf]
    %v300 = vld [vmem:[#allocation5 + $0x8] sm:$0xf]
    %v301 = vld [vmem:[#allocation5 + $0xc] sm:$0xf]
    %v302 = vld [vmem:[#allocation5 + $0x10] sm:$0xf]
    %v303 = vld [vmem:[#allocation5 + $0x14] sm:$0xf]
    %v304 = vld [vmem:[#allocation5 + $0x18] sm:$0xf]
    %v305 = vld [vmem:[#allocation5 + $0x1c] sm:$0xf]
    %v306 = vld [vmem:[#allocation5 + $0x20] sm:$0xf]
    %v307 = vld [vmem:[#allocation5 + $0x24] sm:$0xf]
    %v308 = vld [vmem:[#allocation5 + $0x28] sm:$0xf]
    %v309 = vld [vmem:[#allocation5 + $0x2c] sm:$0xf]
    %v310 = vld [vmem:[#allocation5 + $0x30] sm:$0xf]
    %v311 = vld [vmem:[#allocation5 + $0x34] sm:$0xf]
    %v312 = vld [vmem:[#allocation5 + $0x38] sm:$0xf]
    %v313 = vld [vmem:[#allocation5 + $0x3c] sm:$0xf]
    %v330 = vunpack.c.l.b16 %v298
    %v331 = vunpack.c.l.b16 %v299
    %v332 = vunpack.c.l.b16 %v300
    %v333 = vunpack.c.l.b16 %v301
    %v334 = vunpack.c.l.b16 %v302
    %v335 = vunpack.c.l.b16 %v303
    %v336 = vunpack.c.l.b16 %v304
    %v337 = vunpack.c.l.b16 %v305
    %v338 = vunpack.c.l.b16 %v306
    %v339 = vunpack.c.l.b16 %v307
    %v340 = vunpack.c.l.b16 %v308
    %v341 = vunpack.c.l.b16 %v309
    %v342 = vunpack.c.l.b16 %v310
    %v343 = vunpack.c.l.b16 %v311
    %v344 = vunpack.c.l.b16 %v312
    %v345 = vunpack.c.l.b16 %v313
    %v346 = vpack.c.b16 %v331, %v330
    %v347 = vpack.c.b16 %v333, %v332
    %v348 = vpack.c.b16 %v335, %v334
    %v349 = vpack.c.b16 %v337, %v336
    %v350 = vpack.c.b16 %v339, %v338
    %v351 = vpack.c.b16 %v341, %v340
    %v352 = vpack.c.b16 %v343, %v342
    %v353 = vpack.c.b16 %v345, %v344
    %362 = vmatprep.subr.bf16.mxu0 0
    %363 = vmatpush1.bf16.msra.mxu0 %v353
    %364 = vmatprep.subr.bf16.mxu0 0
    %365 = vmatpush1.bf16.msra.mxu0 %v352
    %366 = vmatprep.subr.bf16.mxu0 0
    %367 = vmatpush1.bf16.msra.mxu0 %v351
    %368 = vmatprep.subr.bf16.mxu0 0
    %369 = vmatpush1.bf16.msra.mxu0 %v350
    %370 = vmatprep.subr.bf16.mxu0 0
    %371 = vmatpush1.bf16.msra.mxu0 %v349
    %372 = vmatprep.subr.bf16.mxu0 0
    %373 = vmatpush1.bf16.msra.mxu0 %v348
    %374 = vmatprep.subr.bf16.mxu0 0
    %375 = vmatpush1.bf16.msra.mxu0 %v347
    %376 = vmatprep.subr.bf16.mxu0 0
    %377 = vmatpush1.bf16.msra.mxu0 %v346
    %378 = vmatprep.subr.bf16.mxu0 0
    %379 = vmatpush2.bf16.msra.mxu0 0
    %380 = vmatprep.subr.bf16.mxu0 0
    %381 = vmatpush2.bf16.msra.mxu0 0
    %382 = vmatprep.subr.bf16.mxu0 0
    %383 = vmatpush2.bf16.msra.mxu0 0
    %384 = vmatprep.subr.bf16.mxu0 0
    %385 = vmatpush2.bf16.msra.mxu0 0
    %386 = vmatprep.subr.bf16.mxu0 0
    %387 = vmatpush2.bf16.msra.mxu0 0
    %388 = vmatprep.subr.bf16.mxu0 0
    %389 = vmatpush2.bf16.msra.mxu0 0
    %390 = vmatprep.subr.bf16.mxu0 0
    %391 = vmatpush2.bf16.msra.mxu0 0
    %392 = vmatprep.subr.bf16.mxu0 0
    %393 = vmatpush2.bf16.msra.mxu0 0
    %394 = vmatprep.mubr.bf16.mxu0 0
    %395 = vmatmul.mubr.bf16.gmra.mxu0 %v297
    %v396 = vpop.f32.mrf.mxu0
    %v397 = vadd.f32 0.0, %v396
    %v398 = vpop.f32.mrf.mxu0
    %v399 = vpop.f32.mrf.mxu0
    %v400 = vadd.f32 0.0, %v399
    %v401 = vpop.f32.mrf.mxu0
    %402 = vdwg.mxu0
    %v403 = vmax.f32 %v397, 0.0
    %v404 = vmax.f32 %v400, 0.0
    %v405 = vpack.c.bf16 %v404, %v403
    %v406 = vld [vmem:[#allocation7] sm:$0xf]
    %v407 = vld [vmem:[#allocation7 + $0x4] sm:$0xf]
    %v408 = vld [vmem:[#allocation7 + $0x8] sm:$0xf]
    %v409 = vld [vmem:[#allocation7 + $0xc] sm:$0xf]
    %v410 = vld [vmem:[#allocation7 + $0x10] sm:$0xf]
    %v411 = vld [vmem:[#allocation7 + $0x14] sm:$0xf]
    %v412 = vld [vmem:[#allocation7 + $0x18] sm:$0xf]
    %v413 = vld [vmem:[#allocation7 + $0x1c] sm:$0xf]
    %v414 = vld [vmem:[#allocation7 + $0x20] sm:$0xf]
    %v415 = vld [vmem:[#allocation7 + $0x24] sm:$0xf]
    %v416 = vld [vmem:[#allocation7 + $0x28] sm:$0xf]
    %v417 = vld [vmem:[#allocation7 + $0x2c] sm:$0xf]
    %v418 = vld [vmem:[#allocation7 + $0x30] sm:$0xf]
    %v419 = vld [vmem:[#allocation7 + $0x34] sm:$0xf]
    %v420 = vld [vmem:[#allocation7 + $0x38] sm:$0xf]
    %v421 = vld [vmem:[#allocation7 + $0x3c] sm:$0xf]
    %v438 = vunpack.c.l.b16 %v406
    %v439 = vunpack.c.l.b16 %v407
    %v440 = vunpack.c.l.b16 %v408
    %v441 = vunpack.c.l.b16 %v409
    %v442 = vunpack.c.l.b16 %v410
    %v443 = vunpack.c.l.b16 %v411
    %v444 = vunpack.c.l.b16 %v412
    %v445 = vunpack.c.l.b16 %v413
    %v446 = vunpack.c.l.b16 %v414
    %v447 = vunpack.c.l.b16 %v415
    %v448 = vunpack.c.l.b16 %v416
    %v449 = vunpack.c.l.b16 %v417
    %v450 = vunpack.c.l.b16 %v418
    %v451 = vunpack.c.l.b16 %v419
    %v452 = vunpack.c.l.b16 %v420
    %v453 = vunpack.c.l.b16 %v421
    %v454 = vpack.c.b16 %v439, %v438
    %v455 = vpack.c.b16 %v441, %v440
    %v456 = vpack.c.b16 %v443, %v442
    %v457 = vpack.c.b16 %v445, %v444
    %v458 = vpack.c.b16 %v447, %v446
    %v459 = vpack.c.b16 %v449, %v448
    %v460 = vpack.c.b16 %v451, %v450
    %v461 = vpack.c.b16 %v453, %v452
    %470 = vmatprep.subr.bf16.mxu0 0
    %471 = vmatpush1.bf16.msra.mxu0 %v461
    %472 = vmatprep.subr.bf16.mxu0 0
    %473 = vmatpush1.bf16.msra.mxu0 %v460
    %474 = vmatprep.subr.bf16.mxu0 0
    %475 = vmatpush1.bf16.msra.mxu0 %v459
    %476 = vmatprep.subr.bf16.mxu0 0
    %477 = vmatpush1.bf16.msra.mxu0 %v458
    %478 = vmatprep.subr.bf16.mxu0 0
    %479 = vmatpush1.bf16.msra.mxu0 %v457
    %480 = vmatprep.subr.bf16.mxu0 0
    %481 = vmatpush1.bf16.msra.mxu0 %v456
    %482 = vmatprep.subr.bf16.mxu0 0
    %483 = vmatpush1.bf16.msra.mxu0 %v455
    %484 = vmatprep.subr.bf16.mxu0 0
    %485 = vmatpush1.bf16.msra.mxu0 %v454
    %486 = vmatprep.subr.bf16.mxu0 0
    %487 = vmatpush2.bf16.msra.mxu0 0
    %488 = vmatprep.subr.bf16.mxu0 0
    %489 = vmatpush2.bf16.msra.mxu0 0
    %490 = vmatprep.subr.bf16.mxu0 0
    %491 = vmatpush2.bf16.msra.mxu0 0
    %492 = vmatprep.subr.bf16.mxu0 0
    %493 = vmatpush2.bf16.msra.mxu0 0
    %494 = vmatprep.subr.bf16.mxu0 0
    %495 = vmatpush2.bf16.msra.mxu0 0
    %496 = vmatprep.subr.bf16.mxu0 0
    %497 = vmatpush2.bf16.msra.mxu0 0
    %498 = vmatprep.subr.bf16.mxu0 0
    %499 = vmatpush2.bf16.msra.mxu0 0
    %500 = vmatprep.subr.bf16.mxu0 0
    %501 = vmatpush2.bf16.msra.mxu0 0
    %502 = vmatprep.mubr.bf16.mxu0 0
    %503 = vmatmul.mubr.bf16.gmra.mxu0 %v405
    %v504 = vpop.f32.mrf.mxu0
    %v505 = vadd.f32 0.0, %v504
    %v506 = vpop.f32.mrf.mxu0
    %v507 = vpop.f32.mrf.mxu0
    %v508 = vadd.f32 0.0, %v507
    %v509 = vpop.f32.mrf.mxu0
    %510 = vdwg.mxu0
    %v511 = vmul.f32 %v79, %v505
    %v512 = vmul.f32 %v84, %v508
    %v513 = vpack.c.bf16 %v512, %v511
    %514 = vmatprep.subr.bf16.mxu0 0
    %515 = vmatpush1.bf16.msra.mxu0 0
    %516 = vmatprep.subr.bf16.mxu0 0
    %517 = vmatpush1.bf16.msra.mxu0 0
    %518 = vmatprep.subr.bf16.mxu0 0
    %519 = vmatpush1.bf16.msra.mxu0 0
    %520 = vmatprep.subr.bf16.mxu0 0
    %521 = vmatpush1.bf16.msra.mxu0 0
    %522 = vmatprep.subr.bf16.mxu0 0
    %523 = vmatpush1.bf16.msra.mxu0 0
    %524 = vmatprep.subr.bf16.mxu0 0
    %525 = vmatpush1.bf16.msra.mxu0 0
    %526 = vmatprep.subr.bf16.mxu0 0
    %527 = vmatpush1.bf16.msra.mxu0 0
    %528 = vmatprep.subr.bf16.mxu0 0
    %529 = vmatpush1.bf16.msra.mxu0 %v513
    %530 = vmatprep.subr.bf16.mxu0 0
    %531 = vmatpush2.bf16.msra.mxu0 0
    %532 = vmatprep.subr.bf16.mxu0 0
    %533 = vmatpush2.bf16.msra.mxu0 0
    %534 = vmatprep.subr.bf16.mxu0 0
    %535 = vmatpush2.bf16.msra.mxu0 0
    %536 = vmatprep.subr.bf16.mxu0 0
    %537 = vmatpush2.bf16.msra.mxu0 0
    %538 = vmatprep.subr.bf16.mxu0 0
    %539 = vmatpush2.bf16.msra.mxu0 0
    %540 = vmatprep.subr.bf16.mxu0 0
    %541 = vmatpush2.bf16.msra.mxu0 0
    %542 = vmatprep.subr.bf16.mxu0 0
    %543 = vmatpush2.bf16.msra.mxu0 0
    %544 = vmatprep.subr.bf16.mxu0 0
    %545 = vmatpush2.bf16.msra.mxu0 0
    %546 = vmatprep.mubr.bf16.mxu0 0
    %547 = vmatmul.mubr.bf16.gmra.mxu0 %v96
    %v548 = vpop.f32.mrf.mxu0
    %v549 = vadd.f32 0.0, %v548
    %v550 = vpop.f32.mrf.mxu0
    %v551 = vpop.f32.mrf.mxu0
    %v552 = vadd.f32 0.0, %v551
    %v553 = vpop.f32.mrf.mxu0
    %554 = vdwg.mxu0
    %v555 = vmul.f32 %v79, %v549
    %v556 = vmul.f32 %v84, %v552
    %557 = vst [vmem:[%s6] sm:$0xff] %v555
    %558 = vst [vmem:[%s6 + $0x8] sm:$0xff] %v556
    // Predicated region
    $region38: #{forward.1} parent=1 // pred_check
      _
    $region39: #{forward.1} parent=1 // pred_check_branch
      %560 = sbr.rel (0) target = $region41
    $region40: #{forward.1} parent=1 // pred_region
      _
    $region41: #{forward.1} parent=1 // pred_fallthru
      _
    // Predicated region
    $region42: #{forward.1} parent=1 // pred_check
      _
    $region43: #{forward.1} parent=1 // pred_check_branch
      %562 = sbr.rel (0) target = $region45
    $region44: #{forward.1} parent=1 // pred_region
      %s564 = ssub.s32 256, 256
      %565 = vsyncadd [#allocation4], %s564
      %s566 = sshll.u32 [#allocation8], 4
      %s567 = int_to_ptr.vmem [resolvable:$true] %s566
      %572 = dma.vmem_to_hbm [thread:$0]  %s567, 256, %s7, [#allocation4], 128, 128, 8
    $region45: #{forward.1} parent=1 // pred_fallthru
      _
    // Predicated region
    $region46: #{forward.1} parent=1 // pred_check
      _
    $region47: #{forward.1} parent=1 // pred_check_branch
      %574 = sbr.rel (0) target = $region49
    $region48: #{forward.1} parent=1 // pred_region
      _
    $region49: #{forward.1} parent=1 // pred_fallthru
      _
    // Predicated region
    $region50: #{forward.1} parent=1 // pred_check
      _
    $region51: #{forward.1} parent=1 // pred_check_branch
      %576 = sbr.rel (0) target = $region53
    $region52: #{forward.1} parent=1 // pred_region
      %577 = dma.done [#allocation4], 256
    $region53: #{forward.1} parent=1 // pred_fallthru
      _
    %578 = vsyncpa [#allocation3], 1
    %579 = vsyncpa [#allocation6], 1
    %580 = vsyncpa [#allocation4], 1

</llo_original>
